<compile_context>
chip_gen: v7x
topology: tpu7x:2x2x1
jax: 0.10.0
libtpu: 0.0.40
codegen_flags: <defaults>
</compile_context>

<pallas_src>
import functools

import jax
import jax.numpy as jnp
from jax.experimental import pallas as pl
from jax.experimental.pallas import tpu as pltpu

_LANE = 128


def _tversky_kernel(x_ref, y_ref, out_ref, tp_acc, sx_acc, cnt_acc, *,
                    num_classes, rows_tail, ragged, smooth, alpha, beta):
    # x_ref  : (1, C, tk, 128) prediction block (native float dtype)
    # y_ref  : (1, tk, 128)    int32 label block
    # out_ref: (1, C, 1)       per-(b, c) tversky index, written on last k step
    # *_acc  : (C, 128) f32    lane-wide accumulators carried across the k axis
    k = pl.program_id(1)
    last = pl.num_programs(1) - 1

    @pl.when(k == 0)
    def _init():
        tp_acc[...] = jnp.zeros_like(tp_acc)
        sx_acc[...] = jnp.zeros_like(sx_acc)
        cnt_acc[...] = jnp.zeros_like(cnt_acc)

    def _accumulate(valid):
        labels = y_ref[0]                                    # (tk, 128) int32
        if valid is not None:
            labels = jnp.where(valid, labels, num_classes)   # sentinel: never matches
        for c in range(num_classes):                         # unrolled over classes
            xc = x_ref[0, c, :, :].astype(jnp.float32)       # (tk, 128)
            if valid is not None:
                xc = jnp.where(valid, xc, 0.0)
            m = labels == c                                  # bool mask, no convert
            tp_acc[pl.ds(c, 1), :] += jnp.sum(jnp.where(m, xc, 0.0),
                                              axis=0, keepdims=True)
            sx_acc[pl.ds(c, 1), :] += jnp.sum(xc, axis=0, keepdims=True)
            cnt_acc[pl.ds(c, 1), :] += jnp.sum(jnp.where(m, 1.0, 0.0),
                                               axis=0, keepdims=True)

    if ragged:
        # Only the final row-block overruns the array; mask it, keep the hot
        # path select-free of the validity test.
        @pl.when(k != last)
        def _body_full():
            _accumulate(None)

        @pl.when(k == last)
        def _body_tail():
            tk, ln = y_ref.shape[1], y_ref.shape[2]
            rows = jax.lax.broadcasted_iota(jnp.int32, (tk, ln), 0)
            _accumulate(rows < rows_tail)
    else:
        _accumulate(None)

    @pl.when(k == last)
    def _finalize():
        tp = jnp.sum(tp_acc[...], axis=-1, keepdims=True)    # (C, 1)
        sx = jnp.sum(sx_acc[...], axis=-1, keepdims=True)
        cnt = jnp.sum(cnt_acc[...], axis=-1, keepdims=True)
        fp = sx - tp        # sum(x * (1 - y)) = sum(x) - tp
        fn = cnt - tp       # sum((1 - x) * y) = sum(y) - tp
        out_ref[0] = (tp + smooth) / (tp + alpha * fp + beta * fn + smooth)


def tversky_loss(x, y_labels, *, smooth=1.0, alpha=0.1, beta=0.9,
                 target_block_bytes=8 * 1024 * 1024):
    """x: (B, C, H, W) float prediction; y_labels: (B, H, W) or (B, 1, H, W) int labels."""
    B, C, H, W = x.shape
    HW = H * W

    if y_labels.ndim == x.ndim:                      # (B, 1, H, W) -> (B, H, W)
        y_labels = y_labels.reshape(B, H, W)
    if not jnp.issubdtype(x.dtype, jnp.floating):
        x = x.astype(jnp.float32)
    y_labels = y_labels.astype(jnp.int32)

    # --- dense (rows, 128) layout; pad only to the next multiple of 128 ------
    hw_p = -(-HW // _LANE) * _LANE
    R = hw_p // _LANE
    x3 = x.reshape(B, C, HW)
    y2 = y_labels.reshape(B, HW)
    if hw_p > HW:
        pad = hw_p - HW
        x3 = jnp.pad(x3, ((0, 0), (0, 0), (0, pad)))                 # zeros: no effect
        y2 = jnp.pad(y2, ((0, 0), (0, pad)), constant_values=C)      # never matches a class
    x4 = x3.reshape(B, C, R, _LANE)                   # free metadata reshapes
    y3 = y2.reshape(B, R, _LANE)

    # --- row tiling: sublane-aligned, ~target_block_bytes per x block --------
    itemsize = jnp.dtype(x.dtype).itemsize
    sub = max(8, 32 // itemsize)                      # 8 (f32) / 16 (bf16) sublane tile
    tk_cap = max(sub, (target_block_bytes // (C * _LANE * itemsize)) // sub * sub)
    if R <= tk_cap:
        tk, num_k, ragged = R, 1, False               # single block: full-dim tile
    else:
        tk = tk_cap
        num_k = -(-R // tk)
        ragged = (R % tk) != 0
    rows_tail = R - (num_k - 1) * tk                  # valid rows in the last block

    x_blk = C * tk * _LANE * itemsize
    y_blk = tk * _LANE * 4
    vmem_limit = int(min(max(2 * (x_blk + y_blk) + (4 << 20), 32 << 20), 112 << 20))

    kernel = functools.partial(
        _tversky_kernel, num_classes=C, rows_tail=rows_tail, ragged=ragged,
        smooth=float(smooth), alpha=float(alpha), beta=float(beta))

    tversky = pl.pallas_call(
        kernel,
        out_shape=jax.ShapeDtypeStruct((B, C, 1), jnp.float32),
        grid=(B, num_k),
        in_specs=[
            pl.BlockSpec((1, C, tk, _LANE), lambda b, k: (b, 0, k, 0)),
            pl.BlockSpec((1, tk, _LANE), lambda b, k: (b, k, 0)),
        ],
        out_specs=pl.BlockSpec((1, C, 1), lambda b, k: (b, 0, 0)),
        scratch_shapes=[
            pltpu.VMEM((C, _LANE), jnp.float32),
            pltpu.VMEM((C, _LANE), jnp.float32),
            pltpu.VMEM((C, _LANE), jnp.float32),
        ],
        compiler_params=pltpu.CompilerParams(
            dimension_semantics=("parallel", "arbitrary"),
            vmem_limit_bytes=vmem_limit),
    )(x4, y3)

    # do_bg=True, batch_dice=False -> mean over all (b, c), then negate.
    # TODO(synk): for B == 1 on v7x one TensorCore idles; a 2-way spatial split
    # emitting partial sums would recover it (not implemented).
    return -jnp.mean(tversky.reshape(B, C))


def _reference_tversky(x, y_labels, smooth=1.0, alpha=0.1, beta=0.9):
    """Pure-JAX mirror of the PyTorch forward for correctness checking."""
    B, C, H, W = x.shape
    y_onehot = jax.nn.one_hot(y_labels, C, dtype=jnp.float32, axis=1)
    xf = x.astype(jnp.float32)
    axes = (2, 3)  # batch_dice=False
    tp = jnp.sum(xf * y_onehot, axis=axes)
    fp = jnp.sum(xf * (1.0 - y_onehot), axis=axes)
    fn = jnp.sum((1.0 - xf) * y_onehot, axis=axes)
    tversky = (tp + smooth) / (tp + alpha * fp + beta * fn + smooth)
    return -jnp.mean(tversky)


if __name__ == "__main__":
    key = jax.random.PRNGKey(0)
    kx, ky = jax.random.split(key)

    # --- small canonical test -------------------------------------------------
    B, C, H, W = 2, 4, 16, 16
    x = jax.random.uniform(kx, (B, C, H, W), dtype=jnp.float32)      # prediction (no nonlin)
    y = jax.random.randint(ky, (B, H, W), 0, C, dtype=jnp.int32)     # label map

    loss = jax.block_until_ready(tversky_loss(x, y))
    ref = jax.block_until_ready(_reference_tversky(x, y))
    assert jnp.allclose(loss, ref, atol=1e-5, rtol=1e-5), (loss, ref)

    # --- exercise the 128-pad + ragged (masked last block) path ---------------
    B2, C2, H2, W2 = 2, 3, 36, 36            # HW=1296 -> 11 rows of 128 after pad
    xb = jax.random.uniform(kx, (B2, C2, H2, W2), dtype=jnp.float32)
    yb = jax.random.randint(ky, (B2, H2, W2), 0, C2, dtype=jnp.int32)
    loss2 = jax.block_until_ready(
        tversky_loss(xb, yb, target_block_bytes=C2 * _LANE * 4 * 8))  # tk=8 -> ragged tail
    ref2 = jax.block_until_ready(_reference_tversky(xb, yb))
    assert jnp.allclose(loss2, ref2, atol=1e-5, rtol=1e-5), (loss2, ref2)

    print("KERNEL_OK")
</pallas_src>

<mosaic_0001>
module attributes {stable_mosaic.version = 11 : i64} {
  func.func @_tversky_kernel(%arg0: i32, %arg1: i32, %arg2: memref<1x4x2x128xf32, #tpu.memory_space<vmem>>, %arg3: memref<1x2x128xi32, #tpu.memory_space<vmem>>, %arg4: memref<1x4x1xf32, #tpu.memory_space<vmem>>, %arg5: memref<4x128xf32, #tpu.memory_space<vmem>>, %arg6: memref<4x128xf32, #tpu.memory_space<vmem>>, %arg7: memref<4x128xf32, #tpu.memory_space<vmem>>) attributes {dimension_semantics = [#tpu.dimension_semantics<parallel>, #tpu.dimension_semantics<arbitrary>], iteration_bounds = array<i64: 2, 1>, scalar_prefetch = 0 : i64, scratch_operands = 3 : i64, tpu.core_type = #tpu.core_type<tc>, window_params = [{transform_indices = @transform_0, window_bounds = array<i64: 1, 4, 2, 128>}, {transform_indices = @transform_1, window_bounds = array<i64: 1, 2, 128>}, {transform_indices = @transform_2, window_bounds = array<i64: 1, 4, 1>}]} {
    %c0_i32 = arith.constant 0 : i32
    %0 = arith.cmpi eq, %arg1, %c0_i32 : i32
    %1 = arith.extui %0 : i1 to i32
    %c0_i32_0 = arith.constant 0 : i32
    %2 = arith.cmpi ne, %1, %c0_i32_0 : i32
    scf.if %2 {
      %cst_90 = arith.constant 0.000000e+00 : f32
      %104 = vector.broadcast %cst_90 : f32 to vector<4x128xf32>
      %c0_91 = arith.constant 0 : index
      %c0_92 = arith.constant 0 : index
      %105 = vector.load %arg5[%c0_91, %c0_92] : memref<4x128xf32, #tpu.memory_space<vmem>>, vector<4x128xf32>
      tpu.vector_store %arg5[%c0_91, %c0_92], %104 {strides = array<i32>} : memref<4x128xf32, #tpu.memory_space<vmem>>, vector<4x128xf32>,
      %cst_93 = arith.constant 0.000000e+00 : f32
      %106 = vector.broadcast %cst_93 : f32 to vector<4x128xf32>
      %c0_94 = arith.constant 0 : index
      %c0_95 = arith.constant 0 : index
      %107 = vector.load %arg6[%c0_94, %c0_95] : memref<4x128xf32, #tpu.memory_space<vmem>>, vector<4x128xf32>
      tpu.vector_store %arg6[%c0_94, %c0_95], %106 {strides = array<i32>} : memref<4x128xf32, #tpu.memory_space<vmem>>, vector<4x128xf32>,
      %cst_96 = arith.constant 0.000000e+00 : f32
      %108 = vector.broadcast %cst_96 : f32 to vector<4x128xf32>
      %c0_97 = arith.constant 0 : index
      %c0_98 = arith.constant 0 : index
      %109 = vector.load %arg7[%c0_97, %c0_98] : memref<4x128xf32, #tpu.memory_space<vmem>>, vector<4x128xf32>
      tpu.vector_store %arg7[%c0_97, %c0_98], %108 {strides = array<i32>} : memref<4x128xf32, #tpu.memory_space<vmem>>, vector<4x128xf32>,
    } else {
    }
    %c0 = arith.constant 0 : index
    %c0_1 = arith.constant 0 : index
    %c0_2 = arith.constant 0 : index
    %3 = vector.load %arg3[%c0, %c0_1, %c0_2] : memref<1x2x128xi32, #tpu.memory_space<vmem>>, vector<1x2x128xi32>
    %4 = vector.shape_cast %3 : vector<1x2x128xi32> to vector<2x128xi32>
    %c0_3 = arith.constant 0 : index
    %c0_4 = arith.constant 0 : index
    %c0_5 = arith.constant 0 : index
    %c0_6 = arith.constant 0 : index
    %5 = vector.load %arg2[%c0_3, %c0_4, %c0_5, %c0_6] : memref<1x4x2x128xf32, #tpu.memory_space<vmem>>, vector<1x1x2x128xf32>
    %6 = vector.shape_cast %5 : vector<1x1x2x128xf32> to vector<2x128xf32>
    %c0_i32_7 = arith.constant 0 : i32
    %7 = vector.broadcast %c0_i32_7 : i32 to vector<2x128xi32>
    %8 = arith.cmpi eq, %4, %7 : vector<2x128xi32>
    %c0_8 = arith.constant 0 : index
    %c0_9 = arith.constant 0 : index
    %9 = vector.load %arg5[%c0_8, %c0_9] : memref<4x128xf32, #tpu.memory_space<vmem>>, vector<1x128xf32>
    %cst = arith.constant 0.000000e+00 : f32
    %10 = vector.broadcast %cst : f32 to vector<2x128xf32>
    %11 = arith.select %8, %6, %10 : vector<2x128xi1>, vector<2x128xf32>
    %cst_10 = arith.constant dense<0.000000e+00> : vector<128xf32>
    %12 = vector.multi_reduction <add>, %11, %cst_10 [0] : vector<2x128xf32> to vector<128xf32>
    %13 = vector.shape_cast %12 : vector<128xf32> to vector<1x128xf32>
    %14 = arith.addf %9, %13 : vector<1x128xf32>
    %c0_11 = arith.constant 0 : index
    %c0_12 = arith.constant 0 : index
    %15 = vector.load %arg5[%c0_11, %c0_12] : memref<4x128xf32, #tpu.memory_space<vmem>>, vector<1x128xf32>
    tpu.vector_store %arg5[%c0_11, %c0_12], %14 {strides = array<i32>} : memref<4x128xf32, #tpu.memory_space<vmem>>, vector<1x128xf32>,
    %c0_13 = arith.constant 0 : index
    %c0_14 = arith.constant 0 : index
    %16 = vector.load %arg6[%c0_13, %c0_14] : memref<4x128xf32, #tpu.memory_space<vmem>>, vector<1x128xf32>
    %cst_15 = arith.constant dense<0.000000e+00> : vector<128xf32>
    %17 = vector.multi_reduction <add>, %6, %cst_15 [0] : vector<2x128xf32> to vector<128xf32>
    %18 = vector.shape_cast %17 : vector<128xf32> to vector<1x128xf32>
    %19 = arith.addf %16, %18 : vector<1x128xf32>
    %c0_16 = arith.constant 0 : index
    %c0_17 = arith.constant 0 : index
    %20 = vector.load %arg6[%c0_16, %c0_17] : memref<4x128xf32, #tpu.memory_space<vmem>>, vector<1x128xf32>
    tpu.vector_store %arg6[%c0_16, %c0_17], %19 {strides = array<i32>} : memref<4x128xf32, #tpu.memory_space<vmem>>, vector<1x128xf32>,
    %c0_18 = arith.constant 0 : index
    %c0_19 = arith.constant 0 : index
    %21 = vector.load %arg7[%c0_18, %c0_19] : memref<4x128xf32, #tpu.memory_space<vmem>>, vector<1x128xf32>
    %cst_20 = arith.constant 1.000000e+00 : f32
    %cst_21 = arith.constant 0.000000e+00 : f32
    %22 = vector.broadcast %cst_20 : f32 to vector<2x128xf32>
    %23 = vector.broadcast %cst_21 : f32 to vector<2x128xf32>
    %24 = arith.select %8, %22, %23 : vector<2x128xi1>, vector<2x128xf32>
    %cst_22 = arith.constant dense<0.000000e+00> : vector<128xf32>
    %25 = vector.multi_reduction <add>, %24, %cst_22 [0] : vector<2x128xf32> to vector<128xf32>
    %26 = vector.shape_cast %25 : vector<128xf32> to vector<1x128xf32>
    %27 = arith.addf %21, %26 : vector<1x128xf32>
    %c0_23 = arith.constant 0 : index
    %c0_24 = arith.constant 0 : index
    %28 = vector.load %arg7[%c0_23, %c0_24] : memref<4x128xf32, #tpu.memory_space<vmem>>, vector<1x128xf32>
    tpu.vector_store %arg7[%c0_23, %c0_24], %27 {strides = array<i32>} : memref<4x128xf32, #tpu.memory_space<vmem>>, vector<1x128xf32>,
    %c0_25 = arith.constant 0 : index
    %c1 = arith.constant 1 : index
    %c0_26 = arith.constant 0 : index
    %c0_27 = arith.constant 0 : index
    %29 = vector.load %arg2[%c0_25, %c1, %c0_26, %c0_27] : memref<1x4x2x128xf32, #tpu.memory_space<vmem>>, vector<1x1x2x128xf32>
    %30 = vector.shape_cast %29 : vector<1x1x2x128xf32> to vector<2x128xf32>
    %c1_i32 = arith.constant 1 : i32
    %31 = vector.broadcast %c1_i32 : i32 to vector<2x128xi32>
    %32 = arith.cmpi eq, %4, %31 : vector<2x128xi32>
    %c1_28 = arith.constant 1 : index
    %c0_29 = arith.constant 0 : index
    %33 = vector.load %arg5[%c1_28, %c0_29] : memref<4x128xf32, #tpu.memory_space<vmem>>, vector<1x128xf32>
    %cst_30 = arith.constant 0.000000e+00 : f32
    %34 = vector.broadcast %cst_30 : f32 to vector<2x128xf32>
    %35 = arith.select %32, %30, %34 : vector<2x128xi1>, vector<2x128xf32>
    %cst_31 = arith.constant dense<0.000000e+00> : vector<128xf32>
    %36 = vector.multi_reduction <add>, %35, %cst_31 [0] : vector<2x128xf32> to vector<128xf32>
    %37 = vector.shape_cast %36 : vector<128xf32> to vector<1x128xf32>
    %38 = arith.addf %33, %37 : vector<1x128xf32>
    %c1_32 = arith.constant 1 : index
    %c0_33 = arith.constant 0 : index
    %39 = vector.load %arg5[%c1_32, %c0_33] : memref<4x128xf32, #tpu.memory_space<vmem>>, vector<1x128xf32>
    tpu.vector_store %arg5[%c1_32, %c0_33], %38 {strides = array<i32>} : memref<4x128xf32, #tpu.memory_space<vmem>>, vector<1x128xf32>,
    %c1_34 = arith.constant 1 : index
    %c0_35 = arith.constant 0 : index
    %40 = vector.load %arg6[%c1_34, %c0_35] : memref<4x128xf32, #tpu.memory_space<vmem>>, vector<1x128xf32>
    %cst_36 = arith.constant dense<0.000000e+00> : vector<128xf32>
    %41 = vector.multi_reduction <add>, %30, %cst_36 [0] : vector<2x128xf32> to vector<128xf32>
    %42 = vector.shape_cast %41 : vector<128xf32> to vector<1x128xf32>
    %43 = arith.addf %40, %42 : vector<1x128xf32>
    %c1_37 = arith.constant 1 : index
    %c0_38 = arith.constant 0 : index
    %44 = vector.load %arg6[%c1_37, %c0_38] : memref<4x128xf32, #tpu.memory_space<vmem>>, vector<1x128xf32>
    tpu.vector_store %arg6[%c1_37, %c0_38], %43 {strides = array<i32>} : memref<4x128xf32, #tpu.memory_space<vmem>>, vector<1x128xf32>,
    %c1_39 = arith.constant 1 : index
    %c0_40 = arith.constant 0 : index
    %45 = vector.load %arg7[%c1_39, %c0_40] : memref<4x128xf32, #tpu.memory_space<vmem>>, vector<1x128xf32>
    %cst_41 = arith.constant 1.000000e+00 : f32
    %cst_42 = arith.constant 0.000000e+00 : f32
    %46 = vector.broadcast %cst_41 : f32 to vector<2x128xf32>
    %47 = vector.broadcast %cst_42 : f32 to vector<2x128xf32>
    %48 = arith.select %32, %46, %47 : vector<2x128xi1>, vector<2x128xf32>
    %cst_43 = arith.constant dense<0.000000e+00> : vector<128xf32>
    %49 = vector.multi_reduction <add>, %48, %cst_43 [0] : vector<2x128xf32> to vector<128xf32>
    %50 = vector.shape_cast %49 : vector<128xf32> to vector<1x128xf32>
    %51 = arith.addf %45, %50 : vector<1x128xf32>
    %c1_44 = arith.constant 1 : index
    %c0_45 = arith.constant 0 : index
    %52 = vector.load %arg7[%c1_44, %c0_45] : memref<4x128xf32, #tpu.memory_space<vmem>>, vector<1x128xf32>
    tpu.vector_store %arg7[%c1_44, %c0_45], %51 {strides = array<i32>} : memref<4x128xf32, #tpu.memory_space<vmem>>, vector<1x128xf32>,
    %c0_46 = arith.constant 0 : index
    %c2 = arith.constant 2 : index
    %c0_47 = arith.constant 0 : index
    %c0_48 = arith.constant 0 : index
    %53 = vector.load %arg2[%c0_46, %c2, %c0_47, %c0_48] : memref<1x4x2x128xf32, #tpu.memory_space<vmem>>, vector<1x1x2x128xf32>
    %54 = vector.shape_cast %53 : vector<1x1x2x128xf32> to vector<2x128xf32>
    %c2_i32 = arith.constant 2 : i32
    %55 = vector.broadcast %c2_i32 : i32 to vector<2x128xi32>
    %56 = arith.cmpi eq, %4, %55 : vector<2x128xi32>
    %c2_49 = arith.constant 2 : index
    %c0_50 = arith.constant 0 : index
    %57 = vector.load %arg5[%c2_49, %c0_50] : memref<4x128xf32, #tpu.memory_space<vmem>>, vector<1x128xf32>
    %cst_51 = arith.constant 0.000000e+00 : f32
    %58 = vector.broadcast %cst_51 : f32 to vector<2x128xf32>
    %59 = arith.select %56, %54, %58 : vector<2x128xi1>, vector<2x128xf32>
    %cst_52 = arith.constant dense<0.000000e+00> : vector<128xf32>
    %60 = vector.multi_reduction <add>, %59, %cst_52 [0] : vector<2x128xf32> to vector<128xf32>
    %61 = vector.shape_cast %60 : vector<128xf32> to vector<1x128xf32>
    %62 = arith.addf %57, %61 : vector<1x128xf32>
    %c2_53 = arith.constant 2 : index
    %c0_54 = arith.constant 0 : index
    %63 = vector.load %arg5[%c2_53, %c0_54] : memref<4x128xf32, #tpu.memory_space<vmem>>, vector<1x128xf32>
    tpu.vector_store %arg5[%c2_53, %c0_54], %62 {strides = array<i32>} : memref<4x128xf32, #tpu.memory_space<vmem>>, vector<1x128xf32>,
    %c2_55 = arith.constant 2 : index
    %c0_56 = arith.constant 0 : index
    %64 = vector.load %arg6[%c2_55, %c0_56] : memref<4x128xf32, #tpu.memory_space<vmem>>, vector<1x128xf32>
    %cst_57 = arith.constant dense<0.000000e+00> : vector<128xf32>
    %65 = vector.multi_reduction <add>, %54, %cst_57 [0] : vector<2x128xf32> to vector<128xf32>
    %66 = vector.shape_cast %65 : vector<128xf32> to vector<1x128xf32>
    %67 = arith.addf %64, %66 : vector<1x128xf32>
    %c2_58 = arith.constant 2 : index
    %c0_59 = arith.constant 0 : index
    %68 = vector.load %arg6[%c2_58, %c0_59] : memref<4x128xf32, #tpu.memory_space<vmem>>, vector<1x128xf32>
    tpu.vector_store %arg6[%c2_58, %c0_59], %67 {strides = array<i32>} : memref<4x128xf32, #tpu.memory_space<vmem>>, vector<1x128xf32>,
    %c2_60 = arith.constant 2 : index
    %c0_61 = arith.constant 0 : index
    %69 = vector.load %arg7[%c2_60, %c0_61] : memref<4x128xf32, #tpu.memory_space<vmem>>, vector<1x128xf32>
    %cst_62 = arith.constant 1.000000e+00 : f32
    %cst_63 = arith.constant 0.000000e+00 : f32
    %70 = vector.broadcast %cst_62 : f32 to vector<2x128xf32>
    %71 = vector.broadcast %cst_63 : f32 to vector<2x128xf32>
    %72 = arith.select %56, %70, %71 : vector<2x128xi1>, vector<2x128xf32>
    %cst_64 = arith.constant dense<0.000000e+00> : vector<128xf32>
    %73 = vector.multi_reduction <add>, %72, %cst_64 [0] : vector<2x128xf32> to vector<128xf32>
    %74 = vector.shape_cast %73 : vector<128xf32> to vector<1x128xf32>
    %75 = arith.addf %69, %74 : vector<1x128xf32>
    %c2_65 = arith.constant 2 : index
    %c0_66 = arith.constant 0 : index
    %76 = vector.load %arg7[%c2_65, %c0_66] : memref<4x128xf32, #tpu.memory_space<vmem>>, vector<1x128xf32>
    tpu.vector_store %arg7[%c2_65, %c0_66], %75 {strides = array<i32>} : memref<4x128xf32, #tpu.memory_space<vmem>>, vector<1x128xf32>,
    %c0_67 = arith.constant 0 : index
    %c3 = arith.constant 3 : index
    %c0_68 = arith.constant 0 : index
    %c0_69 = arith.constant 0 : index
    %77 = vector.load %arg2[%c0_67, %c3, %c0_68, %c0_69] : memref<1x4x2x128xf32, #tpu.memory_space<vmem>>, vector<1x1x2x128xf32>
    %78 = vector.shape_cast %77 : vector<1x1x2x128xf32> to vector<2x128xf32>
    %c3_i32 = arith.constant 3 : i32
    %79 = vector.broadcast %c3_i32 : i32 to vector<2x128xi32>
    %80 = arith.cmpi eq, %4, %79 : vector<2x128xi32>
    %c3_70 = arith.constant 3 : index
    %c0_71 = arith.constant 0 : index
    %81 = vector.load %arg5[%c3_70, %c0_71] : memref<4x128xf32, #tpu.memory_space<vmem>>, vector<1x128xf32>
    %cst_72 = arith.constant 0.000000e+00 : f32
    %82 = vector.broadcast %cst_72 : f32 to vector<2x128xf32>
    %83 = arith.select %80, %78, %82 : vector<2x128xi1>, vector<2x128xf32>
    %cst_73 = arith.constant dense<0.000000e+00> : vector<128xf32>
    %84 = vector.multi_reduction <add>, %83, %cst_73 [0] : vector<2x128xf32> to vector<128xf32>
    %85 = vector.shape_cast %84 : vector<128xf32> to vector<1x128xf32>
    %86 = arith.addf %81, %85 : vector<1x128xf32>
    %c3_74 = arith.constant 3 : index
    %c0_75 = arith.constant 0 : index
    %87 = vector.load %arg5[%c3_74, %c0_75] : memref<4x128xf32, #tpu.memory_space<vmem>>, vector<1x128xf32>
    tpu.vector_store %arg5[%c3_74, %c0_75], %86 {strides = array<i32>} : memref<4x128xf32, #tpu.memory_space<vmem>>, vector<1x128xf32>,
    %c3_76 = arith.constant 3 : index
    %c0_77 = arith.constant 0 : index
    %88 = vector.load %arg6[%c3_76, %c0_77] : memref<4x128xf32, #tpu.memory_space<vmem>>, vector<1x128xf32>
    %cst_78 = arith.constant dense<0.000000e+00> : vector<128xf32>
    %89 = vector.multi_reduction <add>, %78, %cst_78 [0] : vector<2x128xf32> to vector<128xf32>
    %90 = vector.shape_cast %89 : vector<128xf32> to vector<1x128xf32>
    %91 = arith.addf %88, %90 : vector<1x128xf32>
    %c3_79 = arith.constant 3 : index
    %c0_80 = arith.constant 0 : index
    %92 = vector.load %arg6[%c3_79, %c0_80] : memref<4x128xf32, #tpu.memory_space<vmem>>, vector<1x128xf32>
    tpu.vector_store %arg6[%c3_79, %c0_80], %91 {strides = array<i32>} : memref<4x128xf32, #tpu.memory_space<vmem>>, vector<1x128xf32>,
    %c3_81 = arith.constant 3 : index
    %c0_82 = arith.constant 0 : index
    %93 = vector.load %arg7[%c3_81, %c0_82] : memref<4x128xf32, #tpu.memory_space<vmem>>, vector<1x128xf32>
    %cst_83 = arith.constant 1.000000e+00 : f32
    %cst_84 = arith.constant 0.000000e+00 : f32
    %94 = vector.broadcast %cst_83 : f32 to vector<2x128xf32>
    %95 = vector.broadcast %cst_84 : f32 to vector<2x128xf32>
    %96 = arith.select %80, %94, %95 : vector<2x128xi1>, vector<2x128xf32>
    %cst_85 = arith.constant dense<0.000000e+00> : vector<128xf32>
    %97 = vector.multi_reduction <add>, %96, %cst_85 [0] : vector<2x128xf32> to vector<128xf32>
    %98 = vector.shape_cast %97 : vector<128xf32> to vector<1x128xf32>
    %99 = arith.addf %93, %98 : vector<1x128xf32>
    %c3_86 = arith.constant 3 : index
    %c0_87 = arith.constant 0 : index
    %100 = vector.load %arg7[%c3_86, %c0_87] : memref<4x128xf32, #tpu.memory_space<vmem>>, vector<1x128xf32>
    tpu.vector_store %arg7[%c3_86, %c0_87], %99 {strides = array<i32>} : memref<4x128xf32, #tpu.memory_space<vmem>>, vector<1x128xf32>,
    %c0_i32_88 = arith.constant 0 : i32
    %101 = arith.cmpi eq, %arg1, %c0_i32_88 : i32
    %102 = arith.extui %101 : i1 to i32
    %c0_i32_89 = arith.constant 0 : i32
    %103 = arith.cmpi ne, %102, %c0_i32_89 : i32
    scf.if %103 {
      %c0_90 = arith.constant 0 : index
      %c0_91 = arith.constant 0 : index
      %104 = vector.load %arg5[%c0_90, %c0_91] : memref<4x128xf32, #tpu.memory_space<vmem>>, vector<4x128xf32>
      %cst_92 = arith.constant dense<0.000000e+00> : vector<4xf32>
      %105 = vector.multi_reduction <add>, %104, %cst_92 [1] : vector<4x128xf32> to vector<4xf32>
      %106 = vector.shape_cast %105 : vector<4xf32> to vector<4x1xf32>
      %c0_93 = arith.constant 0 : index
      %c0_94 = arith.constant 0 : index
      %107 = vector.load %arg6[%c0_93, %c0_94] : memref<4x128xf32, #tpu.memory_space<vmem>>, vector<4x128xf32>
      %cst_95 = arith.constant dense<0.000000e+00> : vector<4xf32>
      %108 = vector.multi_reduction <add>, %107, %cst_95 [1] : vector<4x128xf32> to vector<4xf32>
      %109 = vector.shape_cast %108 : vector<4xf32> to vector<4x1xf32>
      %c0_96 = arith.constant 0 : index
      %c0_97 = arith.constant 0 : index
      %110 = vector.load %arg7[%c0_96, %c0_97] : memref<4x128xf32, #tpu.memory_space<vmem>>, vector<4x128xf32>
      %cst_98 = arith.constant dense<0.000000e+00> : vector<4xf32>
      %111 = vector.multi_reduction <add>, %110, %cst_98 [1] : vector<4x128xf32> to vector<4xf32>
      %112 = vector.shape_cast %111 : vector<4xf32> to vector<4x1xf32>
      %113 = arith.subf %109, %106 : vector<4x1xf32>
      %114 = arith.subf %112, %106 : vector<4x1xf32>
      %cst_99 = arith.constant 1.000000e+00 : f32
      %115 = vector.broadcast %cst_99 : f32 to vector<4x1xf32>
      %116 = arith.addf %106, %115 : vector<4x1xf32>
      %cst_100 = arith.constant 1.000000e-01 : f32
      %117 = vector.broadcast %cst_100 : f32 to vector<4x1xf32>
      %118 = arith.mulf %117, %113 : vector<4x1xf32>
      %119 = arith.addf %106, %118 : vector<4x1xf32>
      %cst_101 = arith.constant 0.899999976 : f32
      %120 = vector.broadcast %cst_101 : f32 to vector<4x1xf32>
      %121 = arith.mulf %120, %114 : vector<4x1xf32>
      %122 = arith.addf %119, %121 : vector<4x1xf32>
      %cst_102 = arith.constant 1.000000e+00 : f32
      %123 = vector.broadcast %cst_102 : f32 to vector<4x1xf32>
      %124 = arith.addf %122, %123 : vector<4x1xf32>
      %125 = arith.divf %116, %124 : vector<4x1xf32>
      %c0_103 = arith.constant 0 : index
      %c0_104 = arith.constant 0 : index
      %c0_105 = arith.constant 0 : index
      %126 = vector.load %arg4[%c0_103, %c0_104, %c0_105] : memref<1x4x1xf32, #tpu.memory_space<vmem>>, vector<1x4x1xf32>
      %127 = vector.shape_cast %126 : vector<1x4x1xf32> to vector<4x1xf32>
      %128 = vector.shape_cast %125 : vector<4x1xf32> to vector<1x4x1xf32>
      tpu.vector_store %arg4[%c0_103, %c0_104, %c0_105], %128 {strides = array<i32>} : memref<1x4x1xf32, #tpu.memory_space<vmem>>, vector<1x4x1xf32>,
    } else {
    }
    return
  }
  func.func @transform_0(%arg0: i32, %arg1: i32) -> (i32, i32, i32, i32) {
    %c0_i32 = arith.constant 0 : i32
    %c0_i32_0 = arith.constant 0 : i32
    %c0_i32_1 = arith.constant 0 : i32
    return %arg0, %c0_i32, %arg1, %c0_i32_0 : i32, i32, i32, i32
  }
  func.func @transform_1(%arg0: i32, %arg1: i32) -> (i32, i32, i32) {
    %c0_i32 = arith.constant 0 : i32
    %c0_i32_0 = arith.constant 0 : i32
    return %arg0, %arg1, %c0_i32 : i32, i32, i32
  }
  func.func @transform_2(%arg0: i32, %arg1: i32) -> (i32, i32, i32) {
    %c0_i32 = arith.constant 0 : i32
    %c0_i32_0 = arith.constant 0 : i32
    %c0_i32_1 = arith.constant 0 : i32
    return %arg0, %c0_i32, %c0_i32_0 : i32, i32, i32
  }
}

</mosaic_0001>

<llo_original>
// kernel: tpu_custom_call.1
$region0: #{tpu_custom_call.1}
  #allocation0 [shape = 'u32[]', space=smem, size = 0x4, offset = 0x4, fixed_abs, tag = 'smem constant byte address 0x4 - core index']
  #allocation1 [shape = 'u32[144,128]{1,0:T(1,128)}', space=vmem, size = 0x12000, scoped, tag = 'internal scratch']
  #allocation2 [shape = 'f32[4,128]{1,0:T(4,128)}', space=vmem, size = 0x800, scoped, tag = 'scratch operand']
  #allocation3 [shape = 'f32[4,128]{1,0:T(4,128)}', space=vmem, size = 0x800, scoped, tag = 'scratch operand']
  #allocation4 [shape = 'f32[4,128]{1,0:T(4,128)}', space=vmem, size = 0x800, scoped, tag = 'scratch operand']
  %s0 = inlined_call_operand.hbm [shape: f32[2,4,2,128], index: 0, kind: input, shape index: {}]
  %s1 = inlined_call_operand.hbm [shape: s32[2,2,128], index: 1, kind: input, shape index: {}]
  %s2 = inlined_call_operand.vmem [shape: f32[2,4,1], index: 2, kind: output, shape index: {}]
  %s3 = sld [smem:[#allocation0]]
  $region57: #{tpu_custom_call.1} parent=0
    _
  %s5 = ssub.s32 1, %s3
  %s6 = scalar_select 0, %s5, %s3
  $region1: #{tpu_custom_call.1} parent=0
    #allocation5 [shape = 'u8[8192]{0}', space=vmem, size = 0x2000, scoped, tag = 'input window, operand 0']
    #allocation6 [shape = 's32[2]{0}', space=sflag, size = 0x8, scoped, tag = 'scoped memory for tpu_custom_call.1']
    #allocation7 [shape = 'u8[2048]{0}', space=vmem, size = 0x800, scoped, tag = 'input window, operand 1']
    #allocation8 [shape = 's32[2]{0}', space=sflag, size = 0x8, scoped, tag = 'scoped memory for tpu_custom_call.1']
    %7 = vsyncpa [#allocation6], 0
    %s8 = scalar_lea.sflag [#allocation6], 1
    %9 = vsyncpa %s8, 0
    %10 = vsyncpa [#allocation8], 0
    %s11 = scalar_lea.sflag [#allocation8], 1
    %12 = vsyncpa %s11, 0
    loop: start=0, step=1, limit=4
    $region2: #{tpu_custom_call.1} parent=1 // loop_pre_header
      _
    $region3: #{tpu_custom_call.1} parent=1 // loop_header
      %s14 = sphi 0, %s18
      %p15 = scmp.ge.s32.totalorder %s14, 4
      %s21 = sphi 0, %s33
      %s22 = sphi 0, %s29
      %s23 = sphi 0, %s21
      %s24 = sphi 0, %s22
      %s25 = sphi 0, %s23
      %s26 = sphi 0, %s24
      %s38 = sphi 0, %s40
      %s41 = sphi 0, %s38
      %s42 = sphi 0, %s41
      %s58 = sphi 0, %s42
      %s66 = sphi 0, %s68
      %s69 = sphi 0, %s66
      %s70 = sphi 0, %s69
      %s86 = sphi 0, %s70
      %s92 = sphi 0, %s94
      %s95 = sphi 0, %s92
      %s96 = sphi 0, %s95
      %s112 = sphi 0, %s96
    $region4: #{tpu_custom_call.1} parent=1 // loop_header_branch
      %17 = sbr.rel (%p15) target = $region8
    $region5: #{tpu_custom_call.1} parent=1 // loop_body
      %s19 = ssub.s32 %s14, 1
      %s20 = ssub.s32 %s14, 2
      %s27 = sadd.s32 1, %s22
      %p28 = scmp.ge.s32.totalorder %s27, 1
      %s29 = scalar_select %p28, 0, %s27
      %s30 = sadd.s32 1, %s21
      %s31 = scalar_select %p28, %s30, %s21
      %p32 = scmp.ge.s32.totalorder %s31, 2
      %s33 = scalar_select %p32, 0, %s31
      %s34 = ssub.s32 %s21, %s33
      %s35 = ssub.s32 %s22, %s29
      %s36 = sor.u32 %s34, %s35
      %p37 = scmp.eq.s32.totalorder %s36, 0
      %s39 = sadd.s32 %s38, 1
      %s40 = scalar_select %p37, %s38, %s39
      %p43 = pneg %p37
      %p44 = scmp.eq.s32.totalorder %s14, 1
      %p45 = por %p43, %p44
      %p46 = scmp.ne.s32.totalorder %s38, %s41
      %p47 = scmp.eq.s32.totalorder %s14, 0
      %p48 = por %p46, %p47
      %p49 = scmp.ne.s32.totalorder %s38, %s41
      %p50 = scmp.eq.s32.totalorder %s19, 1
      %p51 = por %p49, %p50
      %p52 = scmp.ne.s32.totalorder %s41, %s42
      %p53 = scmp.eq.s32.totalorder %s19, 0
      %p54 = por %p52, %p53
      %p55 = scmp.ne.s32.totalorder %s41, %s42
      %p56 = scmp.eq.s32.totalorder %s20, 1
      %p57 = por %p55, %p56
      %p59 = scmp.ne.s32.totalorder %s42, %s58
      %p60 = scmp.eq.s32.totalorder %s20, 0
      %p61 = por %p59, %p60
      %s62 = ssub.s32 %s21, %s33
      %s63 = ssub.s32 %s22, %s29
      %s64 = sor.u32 %s62, %s63
      %p65 = scmp.eq.s32.totalorder %s64, 0
      %s67 = sadd.s32 %s66, 1
      %s68 = scalar_select %p65, %s66, %s67
      %p71 = pneg %p65
      %p72 = scmp.eq.s32.totalorder %s14, 1
      %p73 = por %p71, %p72
      %p74 = scmp.ne.s32.totalorder %s66, %s69
      %p75 = scmp.eq.s32.totalorder %s14, 0
      %p76 = por %p74, %p75
      %p77 = scmp.ne.s32.totalorder %s66, %s69
      %p78 = scmp.eq.s32.totalorder %s19, 1
      %p79 = por %p77, %p78
      %p80 = scmp.ne.s32.totalorder %s69, %s70
      %p81 = scmp.eq.s32.totalorder %s19, 0
      %p82 = por %p80, %p81
      %p83 = scmp.ne.s32.totalorder %s69, %s70
      %p84 = scmp.eq.s32.totalorder %s20, 1
      %p85 = por %p83, %p84
      %p87 = scmp.ne.s32.totalorder %s70, %s86
      %p88 = scmp.eq.s32.totalorder %s20, 0
      %p89 = por %p87, %p88
      %s90 = ssub.s32 %s21, %s33
      %p91 = scmp.eq.s32.totalorder %s90, 0
      %s93 = sadd.s32 %s92, 1
      %s94 = scalar_select %p91, %s92, %s93
      %p97 = pneg %p91
      %p98 = scmp.eq.s32.totalorder %s14, 1
      %p99 = por %p97, %p98
      %p100 = scmp.ne.s32.totalorder %s92, %s95
      %p101 = scmp.eq.s32.totalorder %s14, 0
      %p102 = por %p100, %p101
      %p103 = scmp.ne.s32.totalorder %s92, %s95
      %p104 = scmp.eq.s32.totalorder %s19, 1
      %p105 = por %p103, %p104
      %p106 = scmp.ne.s32.totalorder %s95, %s96
      %p107 = scmp.eq.s32.totalorder %s19, 0
      %p108 = por %p106, %p107
      %p109 = scmp.ne.s32.totalorder %s95, %s96
      %p110 = scmp.eq.s32.totalorder %s20, 1
      %p111 = por %p109, %p110
      %p113 = scmp.ne.s32.totalorder %s96, %s112
      %p114 = scmp.eq.s32.totalorder %s20, 0
      %p115 = por %p113, %p114
      %p116 = scmp.le.s32.totalorder 1, %s14
      %p117 = scmp.lt.s32.totalorder %s14, 3
      %p118 = pnand %p116, %p117
      %p119 = pneg %p118
      // Predicated region
      $region9: #{tpu_custom_call.1} parent=5 // pred_check
        _
      $region10: #{tpu_custom_call.1} parent=5 // pred_check_branch
        %121 = sbr.rel (%p118) target = $region12
      $region11: #{tpu_custom_call.1} parent=5 // pred_region
        %s122 = ssub.s32 %s14, 1
      $region12: #{tpu_custom_call.1} parent=5 // pred_fallthru
        _
      %p123 = scmp.lt.s32.totalorder %s14, 2
      // Predicated region
      $region13: #{tpu_custom_call.1} parent=5 // pred_check
        %p124 = pneg %p123
      $region14: #{tpu_custom_call.1} parent=5 // pred_check_branch
        %126 = sbr.rel (%p124) target = $region16
      $region15: #{tpu_custom_call.1} parent=5 // pred_region
        // Predicated region
        $region17: #{tpu_custom_call.1} parent=15 // pred_check
          %p127 = pneg %p48
        $region18: #{tpu_custom_call.1} parent=15 // pred_check_branch
          %129 = sbr.rel (%p127) target = $region20
        $region19: #{tpu_custom_call.1} parent=15 // pred_region
          %s130 = sand.u32 %s38, 1
          %s131 = scalar_lea.sflag [#allocation6], %s130
          %s132 = sand.u32 %s38, 1
          %s133 = smul.addr %s132, 8
          %s134 = scalar_lea.vmem [#allocation5], %s133
          %s136 = ssub.s32 128, 128
          %137 = vsyncadd %s131, %s136
          %s138 = smul.addr %s21, 4
          %s139 = sadd.s32 %s22, %s138
          %s140 = smul.addr %s139, 32
          %s141 = scalar_lea.hbm %s0, %s140
          %s142 = sshll.u32 %s134, 4
          %s143 = int_to_ptr.vmem [resolvable:$true] %s142
          %148 = dma.hbm_to_vmem [thread:$0]  %s141, 128, %s143, %s131, 32, 32, 2
        $region20: #{tpu_custom_call.1} parent=15 // pred_fallthru
          _
        // Predicated region
        $region21: #{tpu_custom_call.1} parent=15 // pred_check
          %p149 = pneg %p76
        $region22: #{tpu_custom_call.1} parent=15 // pred_check_branch
          %151 = sbr.rel (%p149) target = $region24
        $region23: #{tpu_custom_call.1} parent=15 // pred_region
          %s152 = sand.u32 %s66, 1
          %s153 = scalar_lea.sflag [#allocation8], %s152
          %s154 = sand.u32 %s66, 1
          %s155 = smul.addr %s154, 2
          %s156 = scalar_lea.vmem [#allocation7], %s155
          %s158 = ssub.s32 32, 32
          %159 = vsyncadd %s153, %s158
          %s160 = sadd.s32 %s22, %s21
          %s161 = smul.addr %s160, 32
          %s162 = scalar_lea.hbm %s1, %s161
          %s164 = sshll.u32 %s156, 4
          %s165 = int_to_ptr.vmem [resolvable:$true] %s164
          %167 = dma.hbm_to_vmem [thread:$0]  %s162, 32, %s165, %s153
        $region24: #{tpu_custom_call.1} parent=15 // pred_fallthru
          _
      $region16: #{tpu_custom_call.1} parent=5 // pred_fallthru
        _
      %p168 = scmp.le.s32.totalorder 1, %s14
      %p169 = scmp.lt.s32.totalorder %s14, 3
      %p170 = pnand %p168, %p169
      %p171 = pneg %p170
      // Predicated region
      $region25: #{tpu_custom_call.1} parent=5 // pred_check
        _
      $region26: #{tpu_custom_call.1} parent=5 // pred_check_branch
        %173 = sbr.rel (%p170) target = $region28
      $region27: #{tpu_custom_call.1} parent=5 // pred_region
        %s174 = ssub.s32 %s14, 1
        %s175 = sand.u32 %s41, 1
        %s176 = scalar_lea.sflag [#allocation6], %s175
        %s177 = sand.u32 %s41, 1
        %s178 = smul.addr %s177, 8
        %s179 = scalar_lea.vmem [#allocation5], %s178
        // Predicated region
        $region29: #{tpu_custom_call.1} parent=27 // pred_check
          %p180 = pneg %p54
        $region30: #{tpu_custom_call.1} parent=27 // pred_check_branch
          %182 = sbr.rel (%p180) target = $region32
        $region31: #{tpu_custom_call.1} parent=27 // pred_region
          %183 = dma.done %s176, 128
        $region32: #{tpu_custom_call.1} parent=27 // pred_fallthru
          _
        %s184 = sand.u32 %s69, 1
        %s185 = scalar_lea.sflag [#allocation8], %s184
        %s186 = sand.u32 %s69, 1
        %s187 = smul.addr %s186, 2
        %s188 = scalar_lea.vmem [#allocation7], %s187
        // Predicated region
        $region33: #{tpu_custom_call.1} parent=27 // pred_check
          %p189 = pneg %p82
        $region34: #{tpu_custom_call.1} parent=27 // pred_check_branch
          %191 = sbr.rel (%p189) target = $region36
        $region35: #{tpu_custom_call.1} parent=27 // pred_region
          %192 = dma.done %s185, 32
        $region36: #{tpu_custom_call.1} parent=27 // pred_fallthru
          _
        %s193 = sand.u32 %s41, 1
        %s194 = scalar_lea.sflag [#allocation6], %s193
        %s195 = sand.u32 %s41, 1
        %s196 = smul.addr %s195, 8
        %s197 = scalar_lea.vmem [#allocation5], %s196
        %p198 = pneg %p54
        %p199 = pneg %p51
        %s200 = sand.u32 %s69, 1
        %s201 = scalar_lea.sflag [#allocation8], %s200
        %s202 = sand.u32 %s69, 1
        %s203 = smul.addr %s202, 2
        %s204 = scalar_lea.vmem [#allocation7], %s203
        %p205 = pneg %p82
        %p206 = pneg %p79
        %p207 = pneg %p108
        %p208 = pneg %p105
        %p209 = scmp.lt.s32.totalorder %s23, 1
        %s210 = scalar_select %p209, %s23, 1
        %s211 = smul.addr %s210, 4
        %s212 = scalar_lea.vmem %s2, %s211
        %p213 = scmp.lt.s32.totalorder %s23, 1
        %s214 = scalar_select %p213, %s23, 1
        %s215 = smul.addr %s214, 4
        %s216 = scalar_lea.vmem %s2, %s215
        %p217 = scmp.eq.s32.totalorder %s24, 0
        // Predicated region
        $region37: #{tpu_custom_call.1} parent=27 // pred_check
          %p218 = pneg %p217
        $region38: #{tpu_custom_call.1} parent=27 // pred_check_branch
          %220 = sbr.rel (%p218) target = $region40
        $region39: #{tpu_custom_call.1} parent=27 // pred_region
          %221 = vst [vmem:[#allocation2] sm:$0xf] 0.0
          %222 = vst [vmem:[#allocation3] sm:$0xf] 0.0
          %223 = vst [vmem:[#allocation4] sm:$0xf] 0.0
        $region40: #{tpu_custom_call.1} parent=27 // pred_fallthru
          _
        %v224 = vld [vmem:[%s188] sm:$0x3]
        %v225 = vld [vmem:[%s179] sm:$0x3]
        %vm226 = vcmp.eq.s32.totalorder %v224, 0
        %v227 = vld [vmem:[#allocation2] sm:$0x1]
        %v228 = vsel %vm226, %v225, 0.0
        %vm229 = vcmask 1041408
        %v230 = vsel %vm229, %v228, 0.0
        %v231 = vrot.slane %v230, 4
        %v232 = vadd.f32 %v230, %v231
        %v233 = vrot.slane %v232, 2
        %v234 = vadd.f32 %v232, %v233
        %v235 = vrot.slane %v234, 1
        %v236 = vadd.f32 %v234, %v235
        %v237 = vadd.f32 %v227, %v236
        %238 = vst [vmem:[#allocation2] sm:$0x1] %v237
        %v239 = vld [vmem:[#allocation3] sm:$0x1]
        %v240 = vsel %vm229, %v225, 0.0
        %v241 = vrot.slane %v240, 4
        %v242 = vadd.f32 %v240, %v241
        %v243 = vrot.slane %v242, 2
        %v244 = vadd.f32 %v242, %v243
        %v245 = vrot.slane %v244, 1
        %v246 = vadd.f32 %v244, %v245
        %v247 = vadd.f32 %v239, %v246
        %248 = vst [vmem:[#allocation3] sm:$0x1] %v247
        %v249 = vld [vmem:[#allocation4] sm:$0x1]
        %v250 = vsel %vm226, 1.0, 0.0
        %v251 = vsel %vm229, %v250, 0.0
        %v252 = vrot.slane %v251, 4
        %v253 = vadd.f32 %v251, %v252
        %v254 = vrot.slane %v253, 2
        %v255 = vadd.f32 %v253, %v254
        %v256 = vrot.slane %v255, 1
        %v257 = vadd.f32 %v255, %v256
        %v258 = vadd.f32 %v249, %v257
        %259 = vst [vmem:[#allocation4] sm:$0x1] %v258
        %s260 = scalar_lea.vmem %s179, 2 [#allocation5]
        %v261 = vld [vmem:[%s260] sm:$0x3]
        %vm262 = vcmp.eq.s32.totalorder %v224, 1
        %v263 = vld [vmem:[#allocation2 + $0x1] sm:$0x1]
        %v264 = vsel %vm262, %v261, 0.0
        %v265 = vsel %vm229, %v264, 0.0
        %v266 = vrot.slane %v265, 4
        %v267 = vadd.f32 %v265, %v266
        %v268 = vrot.slane %v267, 2
        %v269 = vadd.f32 %v267, %v268
        %v270 = vrot.slane %v269, 1
        %v271 = vadd.f32 %v269, %v270
        %v272 = vadd.f32 %v263, %v271
        %273 = vst [vmem:[#allocation2 + $0x1] sm:$0x1] %v272
        %v274 = vld [vmem:[#allocation3 + $0x1] sm:$0x1]
        %v275 = vsel %vm229, %v261, 0.0
        %v276 = vrot.slane %v275, 4
        %v277 = vadd.f32 %v275, %v276
        %v278 = vrot.slane %v277, 2
        %v279 = vadd.f32 %v277, %v278
        %v280 = vrot.slane %v279, 1
        %v281 = vadd.f32 %v279, %v280
        %v282 = vadd.f32 %v274, %v281
        %283 = vst [vmem:[#allocation3 + $0x1] sm:$0x1] %v282
        %v284 = vld [vmem:[#allocation4 + $0x1] sm:$0x1]
        %v285 = vsel %vm262, 1.0, 0.0
        %v286 = vsel %vm229, %v285, 0.0
        %v287 = vrot.slane %v286, 4
        %v288 = vadd.f32 %v286, %v287
        %v289 = vrot.slane %v288, 2
        %v290 = vadd.f32 %v288, %v289
        %v291 = vrot.slane %v290, 1
        %v292 = vadd.f32 %v290, %v291
        %v293 = vadd.f32 %v284, %v292
        %294 = vst [vmem:[#allocation4 + $0x1] sm:$0x1] %v293
        %s295 = scalar_lea.vmem %s179, 4 [#allocation5]
        %v296 = vld [vmem:[%s295] sm:$0x3]
        %vm297 = vcmp.eq.s32.totalorder %v224, 2
        %v298 = vld [vmem:[#allocation2 + $0x2] sm:$0x1]
        %v299 = vsel %vm297, %v296, 0.0
        %v300 = vsel %vm229, %v299, 0.0
        %v301 = vrot.slane %v300, 4
        %v302 = vadd.f32 %v300, %v301
        %v303 = vrot.slane %v302, 2
        %v304 = vadd.f32 %v302, %v303
        %v305 = vrot.slane %v304, 1
        %v306 = vadd.f32 %v304, %v305
        %v307 = vadd.f32 %v298, %v306
        %308 = vst [vmem:[#allocation2 + $0x2] sm:$0x1] %v307
        %v309 = vld [vmem:[#allocation3 + $0x2] sm:$0x1]
        %v310 = vsel %vm229, %v296, 0.0
        %v311 = vrot.slane %v310, 4
        %v312 = vadd.f32 %v310, %v311
        %v313 = vrot.slane %v312, 2
        %v314 = vadd.f32 %v312, %v313
        %v315 = vrot.slane %v314, 1
        %v316 = vadd.f32 %v314, %v315
        %v317 = vadd.f32 %v309, %v316
        %318 = vst [vmem:[#allocation3 + $0x2] sm:$0x1] %v317
        %v319 = vld [vmem:[#allocation4 + $0x2] sm:$0x1]
        %v320 = vsel %vm297, 1.0, 0.0
        %v321 = vsel %vm229, %v320, 0.0
        %v322 = vrot.slane %v321, 4
        %v323 = vadd.f32 %v321, %v322
        %v324 = vrot.slane %v323, 2
        %v325 = vadd.f32 %v323, %v324
        %v326 = vrot.slane %v325, 1
        %v327 = vadd.f32 %v325, %v326
        %v328 = vadd.f32 %v319, %v327
        %329 = vst [vmem:[#allocation4 + $0x2] sm:$0x1] %v328
        %s330 = scalar_lea.vmem %s179, 6 [#allocation5]
        %v331 = vld [vmem:[%s330] sm:$0x3]
        %vm332 = vcmp.eq.s32.totalorder %v224, 3
        %v333 = vld [vmem:[#allocation2 + $0x3] sm:$0x1]
        %v334 = vsel %vm332, %v331, 0.0
        %v335 = vsel %vm229, %v334, 0.0
        %v336 = vrot.slane %v335, 4
        %v337 = vadd.f32 %v335, %v336
        %v338 = vrot.slane %v337, 2
        %v339 = vadd.f32 %v337, %v338
        %v340 = vrot.slane %v339, 1
        %v341 = vadd.f32 %v339, %v340
        %v342 = vadd.f32 %v333, %v341
        %343 = vst [vmem:[#allocation2 + $0x3] sm:$0x1] %v342
        %v344 = vld [vmem:[#allocation3 + $0x3] sm:$0x1]
        %v345 = vsel %vm229, %v331, 0.0
        %v346 = vrot.slane %v345, 4
        %v347 = vadd.f32 %v345, %v346
        %v348 = vrot.slane %v347, 2
        %v349 = vadd.f32 %v347, %v348
        %v350 = vrot.slane %v349, 1
        %v351 = vadd.f32 %v349, %v350
        %v352 = vadd.f32 %v344, %v351
        %353 = vst [vmem:[#allocation3 + $0x3] sm:$0x1] %v352
        %v354 = vld [vmem:[#allocation4 + $0x3] sm:$0x1]
        %v355 = vsel %vm332, 1.0, 0.0
        %v356 = vsel %vm229, %v355, 0.0
        %v357 = vrot.slane %v356, 4
        %v358 = vadd.f32 %v356, %v357
        %v359 = vrot.slane %v358, 2
        %v360 = vadd.f32 %v358, %v359
        %v361 = vrot.slane %v360, 1
        %v362 = vadd.f32 %v360, %v361
        %v363 = vadd.f32 %v354, %v362
        %364 = vst [vmem:[#allocation4 + $0x3] sm:$0x1] %v363
        // Predicated region
        $region41: #{tpu_custom_call.1} parent=27 // pred_check
          %p365 = pneg %p217
        $region42: #{tpu_custom_call.1} parent=27 // pred_check_branch
          %367 = sbr.rel (%p365) target = $region44
        $region43: #{tpu_custom_call.1} parent=27 // pred_region
          %v368 = vld [vmem:[#allocation2] sm:$0xf]
          %vm369 = vcmask 1043456
          %v370 = vsel %vm369, %v368, 0.0
          %371 = vadd.xlane.f32.xlu0 %v370
          %v372 = vpop.xlane.xlu0 %371
          %v373 = vld [vmem:[#allocation3] sm:$0xf]
          %v374 = vsel %vm369, %v373, 0.0
          %375 = vadd.xlane.f32.xlu0 %v374
          %v376 = vpop.xlane.xlu0 %375
          %v377 = vld [vmem:[#allocation4] sm:$0xf]
          %v378 = vsel %vm369, %v377, 0.0
          %379 = vadd.xlane.f32.xlu0 %v378
          %v380 = vpop.xlane.xlu0 %379
          %v381 = vsub.f32 %v376, %v372
          %v382 = vsub.f32 %v380, %v372
          %v383 = vadd.f32 %v372, 1.0
          %v384 = vmul.f32 %v381, 0.1
          %v385 = vadd.f32 %v372, %v384
          %v386 = vmul.f32 %v382, 0.9
          %v387 = vadd.f32 %v385, %v386
          %v388 = vadd.f32 %v387, 1.0
          %v389 = vrcp.pop %v388
          %v390 = vmul.f32 %v383, %v389
          %vm391 = vcmask 3072
          %392 = vst.msk [vmem:[%s216] sm:$0xf] %vm391, %v390
        $region44: #{tpu_custom_call.1} parent=27 // pred_fallthru
          _
        %p393 = scmp.lt.s32.totalorder %s23, 1
        %s394 = scalar_select %p393, %s23, 1
        %s395 = smul.addr %s394, 4
        %s396 = scalar_lea.vmem %s2, %s395
        // Predicated region
        $region45: #{tpu_custom_call.1} parent=27 // pred_check
          %p397 = pneg %p105
        $region46: #{tpu_custom_call.1} parent=27 // pred_check_branch
          %399 = sbr.rel (%p397) target = $region48
        $region47: #{tpu_custom_call.1} parent=27 // pred_region
          _
        $region48: #{tpu_custom_call.1} parent=27 // pred_fallthru
          _
      $region28: #{tpu_custom_call.1} parent=5 // pred_fallthru
        _
      %p400 = scmp.le.s32.totalorder 2, %s14
      // Predicated region
      $region49: #{tpu_custom_call.1} parent=5 // pred_check
        %p401 = pneg %p400
      $region50: #{tpu_custom_call.1} parent=5 // pred_check_branch
        %403 = sbr.rel (%p401) target = $region52
      $region51: #{tpu_custom_call.1} parent=5 // pred_region
        %s404 = ssub.s32 %s14, 2
        // Predicated region
        $region53: #{tpu_custom_call.1} parent=51 // pred_check
          %p405 = pneg %p111
        $region54: #{tpu_custom_call.1} parent=51 // pred_check_branch
          %407 = sbr.rel (%p405) target = $region56
        $region55: #{tpu_custom_call.1} parent=51 // pred_region
          %p408 = scmp.lt.s32.totalorder %s25, 1
          %s409 = scalar_select %p408, %s25, 1
          %s410 = smul.addr %s409, 4
          %s411 = scalar_lea.vmem %s2, %s410
        $region56: #{tpu_custom_call.1} parent=51 // pred_fallthru
          _
      $region52: #{tpu_custom_call.1} parent=5 // pred_fallthru
        _
    $region6: #{tpu_custom_call.1} parent=1 // loop_footer
      %s18 = sadd.s32 1, %s14
    $region7: #{tpu_custom_call.1} parent=1 // loop_footer_branch
      %13 = sbr.rel target = $region3
    $region8: #{tpu_custom_call.1} parent=1 // loop_exit
      _
    %412 = vsyncpa [#allocation6], 1
    %s413 = scalar_lea.sflag [#allocation6], 1
    %414 = vsyncpa %s413, 1
    %415 = vsyncpa [#allocation8], 1
    %s416 = scalar_lea.sflag [#allocation8], 1
    %417 = vsyncpa %s416, 1

</llo_original>
